<compile_context>
chip_gen: v7x
topology: tpu7x:2x2x1
jax: 0.10.0
libtpu: 0.0.40
codegen_flags: <defaults>
</compile_context>

<pallas_src>
import functools

import jax
import jax.numpy as jnp
from jax import lax
from jax.experimental import pallas as pl
from jax.experimental.pallas import tpu as pltpu


# (in_channels, out_channels, dilation) of the HDC_ConvModule_2D stack.
HDC_CFG = [(256, 32, 1), (32, 32, 2), (32, 64, 5),
           (64, 64, 1), (64, 64, 2), (64, 128, 5)]
BN_EPS = 1e-5
HALO = 8                              # zero-halo points on each side of N (>= max dilation 5)
VMEM_LIMIT = 32 * 1024 * 1024

# pltpu.roll is assumed to follow np.roll semantics (result[i] = x[(i - shift) % n]).
# A one-off hardware probe in __main__ flips the sign if the convention is reversed.
_ROLL_NP_CONVENTION = True


def _roll_probe_kernel(x_ref, o_ref):
    o_ref[...] = pltpu.roll(x_ref[...], 1, axis=0)


def detect_roll_convention():
    """Probes the hardware rotate direction once so the conv taps pair correctly."""
    global _ROLL_NP_CONVENTION
    x = jnp.arange(8 * 128, dtype=jnp.float32).reshape(8, 128)
    y = pl.pallas_call(
        _roll_probe_kernel,
        out_shape=jax.ShapeDtypeStruct((8, 128), jnp.float32),
    )(x)
    if bool(jnp.array_equal(y, jnp.roll(x, -1, axis=0))):
        _ROLL_NP_CONVENTION = False      # reversed convention detected
    else:
        _ROLL_NP_CONVENTION = True       # default: np.roll semantics


def _backward_roll(x, offset):
    """Returns y with y[r] = x[(r + offset) % n] along axis 0 (XLU rotate)."""
    n = x.shape[0]
    shift = (-offset) % n if _ROLL_NP_CONVENTION else offset % n
    return pltpu.roll(x, shift, axis=0)


# ----------------------------------------------------------------------------
# Kernel 1: kNN pairwise distances (computed once, shared by q/k/v branches)
# ----------------------------------------------------------------------------
def pairwise_dist_kernel(x_ref, xt_ref, out_ref):
    """out[i, j] = 2*x_i.x_j - |x_i|^2 - |x_j|^2  (negative squared distance)."""
    x = x_ref[0]                                        # (C, N)
    xt = xt_ref[0]                                      # (N, C)
    g = jnp.dot(xt, x, preferred_element_type=jnp.float32)      # (N, N)
    sq_col = jnp.sum(xt * xt, axis=1, keepdims=True)    # (N, 1)
    sq_row = jnp.sum(x * x, axis=0, keepdims=True)      # (1, N)
    out_ref[0] = 2.0 * g - sq_col - sq_row


# ----------------------------------------------------------------------------
# Kernel 2: fused EdgeConv branch (graph feature -> HDC stack -> max over k)
# ----------------------------------------------------------------------------
def _conv3x3_bn_relu(act, w9, scale, bias, dil, k, halo_ref, fold):
    """Dilated 3x3 conv (stride 1, padding=dilation) + folded eval BN + ReLU.

    act:   (N*k, Cin) bf16, rows point-major / neighbour-minor.
    w9:    (9, Cin, Cout) bf16 with tap index t = dw*3 + dh and
           w9[t, ci, co] = torch_w[co, ci, kh=dh, kw=dw]  (kh = point axis,
           kw = neighbour axis).
    scale, bias: (1, Cout) f32 folded BatchNorm scale / bias.
    halo_ref: persistent (N*k + 2*HALO*k, 256) bf16 VMEM scratch; halo rows are
           zero and supply the point-axis padding.
    fold:  single im2col matmul (K = 9*Cin) if True, else 9 matmuls with K = Cin.
    """
    R, cin = act.shape
    cout = w9.shape[-1]
    pad_rows = HALO * k

    # neighbour index of each flat row (for the k-axis conv boundary mask)
    col = lax.broadcasted_iota(jnp.int32, (R, 1), 0) % k
    act32 = act.astype(jnp.float32)        # roll on the 32-bit sublane-rotate path

    taps = []
    acc = jnp.zeros((R, cout), jnp.float32)
    for dw in range(3):
        s = (dw - 1) * dil                 # neighbour (k-axis) offset of this tap
        if s == 0:
            v = act
        else:
            # A shift by s flat rows moves along the neighbour axis; rows whose
            # neighbour index leaves [0, k) are the conv's zero padding (this also
            # masks the rotate's wrap-around rows).
            rolled = _backward_roll(act32, s)
            ok = jnp.logical_and(col + s >= 0, col + s < k)
            v = jnp.where(ok, rolled, 0.0).astype(jnp.bfloat16)
        # (re)write the interior of the zero-halo scratch (halo rows stay zero)
        halo_ref[pad_rows:pad_rows + R, :cin] = v
        for dh in range(3):
            off = pad_rows + (dh - 1) * dil * k      # multiple of k=16 -> aligned
            tap = halo_ref[off:off + R, :cin]
            if fold:
                taps.append(tap)
            else:
                acc = acc + jnp.dot(tap, w9[dw * 3 + dh],
                                    preferred_element_type=jnp.float32)
    if fold:
        lhs = jnp.concatenate(taps, axis=-1)                     # (R, 9*Cin) im2col
        acc = jnp.dot(lhs, w9.reshape(9 * cin, cout),
                      preferred_element_type=jnp.float32)
    y = jnp.maximum(acc * scale + bias, 0.0)                     # folded BN + ReLU
    return y.astype(jnp.bfloat16)


def fused_edgeconv_kernel(*refs):
    """One grid step = one (batch, q/k/v branch).  Everything stays in VMEM."""
    n_hdc = 3 * len(HDC_CFG)
    feat_ref, xt_ref, w1_ref, b1_ref, w2_ref, b2_ref = refs[:6]
    hdc_refs = refs[6:6 + n_hdc]
    out_ref = refs[6 + n_hdc]
    halo_ref = refs[6 + n_hdc + 1]

    _, N, K, C = feat_ref.shape
    feat = feat_ref[0]                                        # (N, K, C) f32
    center = xt_ref[0]                                        # (N, C)    f32

    # zero the halo scratch (its halo rows are never written afterwards)
    halo_ref[...] = jnp.zeros_like(halo_ref)

    # ---- get_graph_feature tail: attention MLP + softmax(k) + weighting ----
    diff = (feat - center[:, None, :]).reshape(N * K, C).astype(jnp.bfloat16)
    h = jnp.dot(diff, w1_ref[0], preferred_element_type=jnp.float32) + b1_ref[0]
    h = jnp.maximum(h, 0.0).astype(jnp.bfloat16)              # (N*K, 64)
    s = jnp.dot(h, w2_ref[0], preferred_element_type=jnp.float32) + b2_ref[0]
    s3 = s.reshape(N, K, s.shape[-1])                         # (N, K, 128)

    m = jnp.max(s3, axis=1, keepdims=True)                    # exact softmax over k
    e = jnp.exp(s3 - m)
    attn = e / jnp.sum(e, axis=1, keepdims=True)

    weighted = feat * attn                                    # requires C == 128
    centerk = jnp.broadcast_to(center[:, None, :], (N, K, C))
    x0 = jnp.concatenate([(weighted - centerk).astype(jnp.bfloat16),
                          centerk.astype(jnp.bfloat16)], axis=-1)   # (N, K, 2C)
    act = x0.reshape(N * K, 2 * C)                            # (N*K, 256) bf16

    # ---- HDC dilated conv stack, all intermediates in VMEM ----
    for li, (cin, cout, dil) in enumerate(HDC_CFG):
        act = _conv3x3_bn_relu(act,
                               hdc_refs[3 * li][0],
                               hdc_refs[3 * li + 1][0],
                               hdc_refs[3 * li + 2][0],
                               dil, K, halo_ref,
                               fold=(cin <= 64))

    # ---- max over the neighbour (k) axis ----
    actf = act.astype(jnp.float32)
    out = jnp.max(actf.reshape(N, K, actf.shape[-1]), axis=1)    # (N, 128)
    out_ref[...] = out.reshape(1, 1, N, out.shape[-1])


def _branch_spec(arr):
    """BlockSpec selecting one branch (leading axis of size 3) per grid step."""
    zeros = (0,) * (arr.ndim - 1)
    return pl.BlockSpec((1,) + tuple(arr.shape[1:]),
                        lambda b, r, _z=zeros: (r,) + _z)


def fused_edge_conv(feature, xt, p):
    """feature: (B, N, k, C) f32, xt: (B, N, C) f32 -> (B, 3, N, 128) f32."""
    B, N, K, C = feature.shape

    hdc_arrays, hdc_specs = [], []
    for layer in p['hdc']:
        for name in ('w', 'scale', 'bias'):
            arr = layer[name]
            hdc_arrays.append(arr)
            hdc_specs.append(_branch_spec(arr))

    in_specs = [
        pl.BlockSpec((1, N, K, C), lambda b, r: (b, 0, 0, 0)),
        pl.BlockSpec((1, N, C), lambda b, r: (b, 0, 0)),
        _branch_spec(p['w1']), _branch_spec(p['b1']),
        _branch_spec(p['w2']), _branch_spec(p['b2']),
    ] + hdc_specs

    return pl.pallas_call(
        fused_edgeconv_kernel,
        out_shape=jax.ShapeDtypeStruct((B, 3, N, 128), jnp.float32),
        grid=(B, 3),
        in_specs=in_specs,
        out_specs=pl.BlockSpec((1, 1, N, 128), lambda b, r: (b, r, 0, 0)),
        scratch_shapes=[pltpu.VMEM((N * K + 2 * HALO * K, 2 * C), jnp.bfloat16)],
        compiler_params=pltpu.CompilerParams(
            dimension_semantics=("parallel", "parallel"),
            vmem_limit_bytes=VMEM_LIMIT),
    )(feature, xt, p['w1'], p['b1'], p['w2'], p['b2'], *hdc_arrays)


# ----------------------------------------------------------------------------
# Kernel 3: multi-head attention over the point axis (heads unrolled in-kernel)
# ----------------------------------------------------------------------------
def head_attn_kernel(qkv_ref, out_ref, *, num_head, indices):
    # Note: the reference EDformer applies softmax(Q K^T) with NO 1/sqrt(d) scale.
    for h in range(num_head):
        r0 = h * indices
        qh = qkv_ref[0, 0, r0:r0 + indices, :].astype(jnp.bfloat16)   # (ind, Cf)
        kh = qkv_ref[0, 1, r0:r0 + indices, :].astype(jnp.bfloat16)
        vh = qkv_ref[0, 2, r0:r0 + indices, :].astype(jnp.bfloat16)
        # s[c, d] = sum_n q[n, c] * k[n, d]  ==  Q K^T in the PyTorch layout
        s = lax.dot_general(qh, kh, (((0,), (0,)), ((), ())),
                            preferred_element_type=jnp.float32)       # (Cf, Cf)
        m = jnp.max(s, axis=-1, keepdims=True)
        e = jnp.exp(s - m)
        attn = (e / jnp.sum(e, axis=-1, keepdims=True)).astype(jnp.bfloat16)
        # out[n, c] = sum_d v[n, d] * attn[c, d]
        oh = lax.dot_general(vh, attn, (((1,), (1,)), ((), ())),
                             preferred_element_type=jnp.float32)      # (ind, Cf)
        out_ref[0, r0:r0 + indices, :] = oh                           # direct store


# ----------------------------------------------------------------------------
# Forward pass
# ----------------------------------------------------------------------------
def edformer_forward(x, params, num_head=8, k_nn=16):
    """x: (B, dims, N) PyTorch layout.  Returns (B, 128, num_head*(dims//num_head))."""
    B, dims, N = x.shape
    xt = jnp.transpose(x, (0, 2, 1))                          # (B, N, dims)

    # --- kNN front-end, computed once and shared by the q/k/v branches ---
    dist = pl.pallas_call(
        pairwise_dist_kernel,
        out_shape=jax.ShapeDtypeStruct((B, N, N), jnp.float32),
        grid=(B,),
        in_specs=[pl.BlockSpec((1, dims, N), lambda b: (b, 0, 0)),
                  pl.BlockSpec((1, N, dims), lambda b: (b, 0, 0))],
        out_specs=pl.BlockSpec((1, N, N), lambda b: (b, 0, 0)),
        compiler_params=pltpu.CompilerParams(
            dimension_semantics=("parallel",)),
    )(x, xt)

    # TODO(synk): top-k neighbour selection + row gather stay in XLA; they could be
    # fused into the edgeconv kernel via PrefetchScalarGridSpec + in-kernel gather.
    _, idx = lax.top_k(dist, k_nn)                            # (B, N, k)
    feature = jax.vmap(lambda xb, ib: xb[ib])(xt, idx)        # (B, N, k, dims)

    # --- fused EdgeConv for all three (q, k, v) branches -> (B, 3, N, 128) ---
    qkv = fused_edge_conv(feature, xt, params)

    # --- multi-head attention over the point axis ---
    indices = dims // num_head
    Cf = qkv.shape[-1]
    net = pl.pallas_call(
        functools.partial(head_attn_kernel, num_head=num_head, indices=indices),
        out_shape=jax.ShapeDtypeStruct((B, num_head * indices, Cf), jnp.float32),
        grid=(B,),
        in_specs=[pl.BlockSpec((1, 3, N, Cf), lambda b: (b, 0, 0, 0))],
        out_specs=pl.BlockSpec((1, num_head * indices, Cf), lambda b: (b, 0, 0)),
        compiler_params=pltpu.CompilerParams(
            dimension_semantics=("parallel",)),
    )(qkv)
    # back to PyTorch layout (B, 128 feature channels, num_head*indices points)
    return jnp.transpose(net, (0, 2, 1))


# ----------------------------------------------------------------------------
# Deterministic parameter initialization (branches stacked on a leading 3-axis)
# ----------------------------------------------------------------------------
def init_params(key, dims):
    C = dims
    kq, kk, kv = jax.random.split(key, 3)

    def branch(bkey):
        ks = jax.random.split(bkey, 4 + len(HDC_CFG))
        w1 = jax.random.normal(ks[0], (C, 64)) * (2.0 / C) ** 0.5
        b1 = jax.random.normal(ks[1], (1, 64)) * 0.01
        w2 = jax.random.normal(ks[2], (64, 128)) * (2.0 / 64) ** 0.5
        b2 = jax.random.normal(ks[3], (1, 128)) * 0.01
        layers = []
        for i, (cin, cout, _dil) in enumerate(HDC_CFG):
            kw_, kb_ = jax.random.split(ks[4 + i], 2)
            w = jax.random.normal(kw_, (3, 3, cin, cout)) * (2.0 / (cin * 9)) ** 0.5
            conv_b = jax.random.normal(kb_, (cout,)) * 0.01
            # eval-mode BN with fresh stats (gamma=1, beta=0, mean=0, var=1),
            # folded with the conv bias into one per-channel scale/bias pair.
            scale = jnp.ones((cout,)) / jnp.sqrt(1.0 + BN_EPS)
            eff_bias = conv_b * scale
            # kernel tap layout: w_r[kw*3 + kh, ci, co] = w[kh, kw, ci, co]
            w_r = jnp.transpose(w, (1, 0, 2, 3)).reshape(9, cin, cout)
            layers.append((w_r, scale.reshape(1, cout), eff_bias.reshape(1, cout)))
        return w1, b1, w2, b2, layers

    branches = [branch(bk) for bk in (kq, kk, kv)]
    stack = lambda xs, dt: jnp.stack(xs).astype(dt)
    params = {
        'w1': stack([b[0] for b in branches], jnp.bfloat16),
        'b1': stack([b[1] for b in branches], jnp.float32),
        'w2': stack([b[2] for b in branches], jnp.bfloat16),
        'b2': stack([b[3] for b in branches], jnp.float32),
        'hdc': [],
    }
    for li in range(len(HDC_CFG)):
        params['hdc'].append({
            'w': stack([b[4][li][0] for b in branches], jnp.bfloat16),
            'scale': stack([b[4][li][1] for b in branches], jnp.float32),
            'bias': stack([b[4][li][2] for b in branches], jnp.float32),
        })
    return params


# ----------------------------------------------------------------------------
if __name__ == "__main__":
    detect_roll_convention()

    key = jax.random.PRNGKey(0)
    kx, kp = jax.random.split(key)

    # dims must be 128 (forced by the module); N >= num_head * (dims // num_head)
    B, dims, N = 2, 128, 128
    x = jax.random.normal(kx, (B, dims, N), dtype=jnp.float32)
    params = init_params(kp, dims)

    out = jax.jit(edformer_forward)(x, params)
    out = jax.block_until_ready(out)

    assert out.shape == (B, 128, dims), out.shape
    assert bool(jnp.all(jnp.isfinite(out)))
    print("KERNEL_OK")
</pallas_src>

<mosaic_0001>
module attributes {stable_mosaic.version = 11 : i64} {
  func.func @_roll_probe_kernel(%arg0: memref<8x128xf32, #tpu.memory_space<vmem>>, %arg1: memref<8x128xf32, #tpu.memory_space<vmem>>) attributes {dimension_semantics = [], scalar_prefetch = 0 : i64, scratch_operands = 0 : i64, tpu.core_type = #tpu.core_type<tc>} {
    %c0 = arith.constant 0 : index
    %c0_0 = arith.constant 0 : index
    %0 = vector.load %arg0[%c0, %c0_0] : memref<8x128xf32, #tpu.memory_space<vmem>>, vector<8x128xf32>
    %c1_i32 = arith.constant 1 : i32
    %1 = tpu.dynamic_rotate %0 by %c1_i32 dim 0 : vector<8x128xf32>, i32 -> vector<8x128xf32>
    %c0_1 = arith.constant 0 : index
    %c0_2 = arith.constant 0 : index
    %2 = vector.load %arg1[%c0_1, %c0_2] : memref<8x128xf32, #tpu.memory_space<vmem>>, vector<8x128xf32>
    tpu.vector_store %arg1[%c0_1, %c0_2], %1 {strides = array<i32>} : memref<8x128xf32, #tpu.memory_space<vmem>>, vector<8x128xf32>,
    return
  }
}

</mosaic_0001>

<llo_original>
// kernel: tpu_custom_call.1
$region0: #{tpu_custom_call.1}
  #allocation0 [shape = 'u32[]', space=smem, size = 0x4, offset = 0x4, fixed_abs, tag = 'smem constant byte address 0x4 - core index']
  #allocation1 [shape = 'u32[144,128]{1,0:T(1,128)}', space=vmem, size = 0x12000, scoped, tag = 'internal scratch']
  %s0 = inlined_call_operand.hbm [shape: f32[8,128], index: 0, kind: input, shape index: {}]
  %s1 = inlined_call_operand.hbm [shape: f32[8,128], index: 1, kind: output, shape index: {}]
  %s2 = sld [smem:[#allocation0]]
  $region18: #{tpu_custom_call.1} parent=0
    _
  %s4 = ssub.s32 1, %s2
  %s5 = scalar_select 0, %s4, %s2
  $region1: #{tpu_custom_call.1} parent=0
    #allocation2 [shape = 'u8[4096]{0}', space=vmem, size = 0x1000, scoped, tag = 'input window, operand 0, single buffered']
    #allocation3 [shape = 's32[1]{0}', space=sflag, size = 0x4, scoped, tag = 'scoped memory for tpu_custom_call.1']
    #allocation4 [shape = 's32[1]{0}', space=sflag, size = 0x4, scoped, tag = 'scoped memory for tpu_custom_call.1']
    #allocation5 [shape = 'u8[4096]{0}', space=vmem, size = 0x1000, scoped, tag = 'output window, operand 0, single buffered']
    %6 = vsyncpa [#allocation3], 0
    %7 = vsyncpa [#allocation4], 0
    // Predicated region
    $region2: #{tpu_custom_call.1} parent=1 // pred_check
      _
    $region3: #{tpu_custom_call.1} parent=1 // pred_check_branch
      %9 = sbr.rel (0) target = $region5
    $region4: #{tpu_custom_call.1} parent=1 // pred_region
      %s11 = ssub.s32 128, 128
      %12 = vsyncadd [#allocation3], %s11
      %s14 = sshll.u32 [#allocation2], 4
      %s15 = int_to_ptr.vmem [resolvable:$true] %s14
      %17 = dma.hbm_to_vmem [thread:$0]  %s0, 128, %s15, [#allocation3]
    $region5: #{tpu_custom_call.1} parent=1 // pred_fallthru
      _
    // Predicated region
    $region6: #{tpu_custom_call.1} parent=1 // pred_check
      _
    $region7: #{tpu_custom_call.1} parent=1 // pred_check_branch
      %19 = sbr.rel (0) target = $region9
    $region8: #{tpu_custom_call.1} parent=1 // pred_region
      %20 = dma.done [#allocation3], 128
    $region9: #{tpu_custom_call.1} parent=1 // pred_fallthru
      _
    %v21 = vld [vmem:[#allocation2] sm:$0xff]
    %v22 = vrot.slane %v21, 7
    %23 = vst [vmem:[#allocation5] sm:$0xff] %v22
    // Predicated region
    $region10: #{tpu_custom_call.1} parent=1 // pred_check
      _
    $region11: #{tpu_custom_call.1} parent=1 // pred_check_branch
      %25 = sbr.rel (0) target = $region13
    $region12: #{tpu_custom_call.1} parent=1 // pred_region
      %s27 = ssub.s32 128, 128
      %28 = vsyncadd [#allocation4], %s27
      %s30 = sshll.u32 [#allocation5], 4
      %s31 = int_to_ptr.vmem [resolvable:$true] %s30
      %33 = dma.vmem_to_hbm [thread:$0]  %s31, 128, %s1, [#allocation4]
    $region13: #{tpu_custom_call.1} parent=1 // pred_fallthru
      _
    // Predicated region
    $region14: #{tpu_custom_call.1} parent=1 // pred_check
      _
    $region15: #{tpu_custom_call.1} parent=1 // pred_check_branch
      %35 = sbr.rel (0) target = $region17
    $region16: #{tpu_custom_call.1} parent=1 // pred_region
      %36 = dma.done [#allocation4], 128
    $region17: #{tpu_custom_call.1} parent=1 // pred_fallthru
      _
    %37 = vsyncpa [#allocation3], 1
    %38 = vsyncpa [#allocation4], 1

</llo_original>
